<compile_context>
chip_gen: v7x
topology: tpu7x:2x2x1
jax: 0.10.0
libtpu: 0.0.40
codegen_flags: <defaults>
</compile_context>

<pallas_src>
import numpy as np
import jax
import jax.numpy as jnp
from jax.experimental import pallas as pl
from jax.experimental.pallas import tpu as pltpu


def _round_up(x, m):
    return ((x + m - 1) // m) * m


def _cdiv(a, b):
    return -(-a // b)


def _vmem_estimate(tile_n, tile_k, lanes, in_bytes):
    a_bufs = 2 * tile_n * tile_k * in_bytes      # A stream, double buffered
    x_bufs = 2 * tile_k * lanes * in_bytes       # x stream, double buffered
    o_bufs = 2 * tile_n * lanes * 4              # output, double buffered
    acc = tile_n * lanes * 4                     # f32 accumulator scratch
    return a_bufs + x_bufs + o_bufs + acc


def _choose_tiles(n_rows, n_contract, lanes, in_bytes, *, cap_n=256, cap_k=512,
                  budget=40 * 1024 * 1024, prefer_split_rows=False):
    """Pick (tile_n, tile_k).

    tile_n (A/output row, sublane dim): balanced multiple of 8.
    tile_k (A lane dim == contraction): full N for small graphs, else a balanced
    multiple of 128 (keeps MXU passes full and satisfies the (8,128) BlockSpec
    constraint); the ragged tail is masked in-kernel.
    Both are shrunk until the double-buffered working set fits a v7x-safe budget.
    """
    if n_contract <= cap_k:
        tile_k = n_contract
    else:
        steps = _cdiv(n_contract, cap_k)
        tile_k = min(cap_k, _round_up(_cdiv(n_contract, steps), 128))

    if n_rows <= cap_n:
        tile_n = _round_up(n_rows, 8)
    else:
        steps = _cdiv(n_rows, cap_n)
        tile_n = min(cap_n, _round_up(_cdiv(n_rows, steps), 8))

    while _vmem_estimate(tile_n, tile_k, lanes, in_bytes) > budget and tile_k > 128:
        tile_k = max(128, _round_up(tile_k // 2, 128))
    while _vmem_estimate(tile_n, tile_k, lanes, in_bytes) > budget and tile_n > 8:
        tile_n = max(8, _round_up(tile_n // 2, 8))

    # v7x has 2 TensorCores: make sure the row axis has >= 2 parallel steps when
    # it is the only parallel work available.
    if prefer_split_rows and n_rows >= 16 and _cdiv(n_rows, tile_n) < 2:
        tile_n = _round_up(_cdiv(n_rows, 2), 8)

    return tile_n, tile_k


def _make_prop_relu_kernel(k_axis, tile_k, n_valid, mask_k):
    """acc += A_block @ x_block over the last ("arbitrary") grid axis;
    ReLU + cast + store in the final-k epilogue."""

    def kernel(a_ref, x_ref, o_ref, acc_ref):
        k = pl.program_id(k_axis)

        @pl.when(k == 0)
        def _init():
            acc_ref[...] = jnp.zeros_like(acc_ref)

        a = a_ref[...]
        if mask_k:
            # The last K tile reads past N in A (OOB garbage): zero those columns.
            col = jax.lax.broadcasted_iota(jnp.int32, a.shape, 1)
            a = jnp.where(k * tile_k + col < n_valid, a, jnp.zeros_like(a))

        acc_ref[...] += jnp.dot(a, x_ref[...], preferred_element_type=jnp.float32)

        @pl.when(k == pl.num_programs(k_axis) - 1)
        def _finalize():
            o_ref[...] = jnp.maximum(acc_ref[...], 0.0).astype(o_ref.dtype)

    return kernel


def sgc_forward(x, A, w, *, compute_dtype=None):
    """H = relu(einsum(A, x) @ w.T)   (w is the torch nn.Linear weight [out, in]).

    compute_dtype: optionally stream A / x into the kernel as e.g. bf16
    (accumulation stays f32 on the MXU). Default keeps the input dtype.
    """
    B, N, F = x.shape
    out_dtype = x.dtype
    out_bytes = jnp.dtype(out_dtype).itemsize

    # Feature transform first (associativity); contraction on w's 2nd axis so no
    # materialized transpose of w.
    xw = jnp.einsum('bnf,gf->bng', x, w)

    stream_dtype = jnp.dtype(compute_dtype) if compute_dtype is not None else jnp.dtype(A.dtype)
    in_bytes = stream_dtype.itemsize

    if A.ndim == 2:
        # -------- shared adjacency: fold batch into lanes, read A exactly once --------
        lanes = B * F
        tile_n, tile_k = _choose_tiles(N, N, lanes, in_bytes, prefer_split_rows=True)
        k_pad = _round_up(N, tile_k)
        mask_k = (k_pad != N)

        xw_f = jnp.transpose(xw, (1, 0, 2)).reshape(N, lanes)
        if mask_k:
            # Cheap O(N*B*F) zero-pad of x's contraction rows only; A is never padded.
            xw_f = jnp.pad(xw_f, ((0, k_pad - N), (0, 0)))

        A_in = A.astype(stream_dtype) if compute_dtype is not None else A
        xw_f = xw_f.astype(stream_dtype) if compute_dtype is not None else xw_f

        grid = (pl.cdiv(N, tile_n), k_pad // tile_k)
        kernel = _make_prop_relu_kernel(k_axis=1, tile_k=tile_k, n_valid=N, mask_k=mask_k)

        est = _vmem_estimate(tile_n, tile_k, lanes, in_bytes)
        vmem_limit = int(min(64 * 1024 * 1024, max(32 * 1024 * 1024, 2 * est)))
        cost = pl.CostEstimate(
            flops=2 * N * N * lanes,
            transcendentals=0,
            bytes_accessed=int(N * N * in_bytes + k_pad * lanes * in_bytes
                               + N * lanes * out_bytes))

        out = pl.pallas_call(
            kernel,
            out_shape=jax.ShapeDtypeStruct((N, lanes), out_dtype),
            grid=grid,
            in_specs=[
                pl.BlockSpec((tile_n, tile_k), lambda i, k: (i, k)),     # A row/col tile
                pl.BlockSpec((tile_k, lanes), lambda i, k: (k, 0)),      # folded x @ W.T
            ],
            out_specs=pl.BlockSpec((tile_n, lanes), lambda i, k: (i, 0)),
            scratch_shapes=[pltpu.VMEM((tile_n, lanes), jnp.float32)],
            compiler_params=pltpu.CompilerParams(
                dimension_semantics=("parallel", "arbitrary"),
                vmem_limit_bytes=vmem_limit),
            cost_estimate=cost,
        )(A_in, xw_f)

        # unfold lanes back to [B, N, F]
        return jnp.transpose(out.reshape(N, B, F), (1, 0, 2))

    # -------- per-batch adjacency --------
    tile_n, tile_k = _choose_tiles(N, N, F, in_bytes, prefer_split_rows=(B < 2))
    k_pad = _round_up(N, tile_k)
    mask_k = (k_pad != N)

    xw_p = jnp.pad(xw, ((0, 0), (0, k_pad - N), (0, 0))) if mask_k else xw
    A_in = A.astype(stream_dtype) if compute_dtype is not None else A
    xw_p = xw_p.astype(stream_dtype) if compute_dtype is not None else xw_p

    grid = (B, pl.cdiv(N, tile_n), k_pad // tile_k)
    kernel = _make_prop_relu_kernel(k_axis=2, tile_k=tile_k, n_valid=N, mask_k=mask_k)

    est = _vmem_estimate(tile_n, tile_k, F, in_bytes)
    vmem_limit = int(min(64 * 1024 * 1024, max(32 * 1024 * 1024, 2 * est)))
    cost = pl.CostEstimate(
        flops=2 * B * N * N * F,
        transcendentals=0,
        bytes_accessed=int(B * N * N * in_bytes + B * k_pad * F * in_bytes
                           + B * N * F * out_bytes))

    out = pl.pallas_call(
        kernel,
        out_shape=jax.ShapeDtypeStruct((B, N, F), out_dtype),
        grid=grid,
        in_specs=[
            pl.BlockSpec((None, tile_n, tile_k), lambda b, i, k: (b, i, k)),  # A[b]
            pl.BlockSpec((None, tile_k, F), lambda b, i, k: (b, k, 0)),       # (x @ W.T)[b]
        ],
        out_specs=pl.BlockSpec((None, tile_n, F), lambda b, i, k: (b, i, 0)),
        scratch_shapes=[pltpu.VMEM((tile_n, F), jnp.float32)],
        compiler_params=pltpu.CompilerParams(
            dimension_semantics=("parallel", "parallel", "arbitrary"),
            vmem_limit_bytes=vmem_limit),
        cost_estimate=cost,
    )(A_in, xw_p)

    return out


# ----------------------------------------------------------------------------
# Pure-JAX reference (mirrors the PyTorch forward exactly)
# ----------------------------------------------------------------------------
def reference_forward(x, A, w):
    if A.ndim == 2:
        H = jnp.einsum('ij,bjk->bik', A, x)
    else:
        H = jnp.einsum('bij,bjk->bik', A, x)
    H = H @ w.T                       # nn.Linear(nfeat, nfeat, bias=False)
    return jax.nn.relu(H)


if __name__ == "__main__":
    key = jax.random.PRNGKey(0)
    kx, ka2, ka3, kw, kx2, ka4, ka5 = jax.random.split(key, 7)

    # small shapes consistent with the module
    B, N, F = 2, 16, 32
    x = jax.random.normal(kx, (B, N, F), jnp.float32)
    A2 = jax.nn.softmax(jax.random.normal(ka2, (N, N), jnp.float32), axis=-1)
    A3 = jax.nn.softmax(jax.random.normal(ka3, (B, N, N), jnp.float32), axis=-1)
    W = jax.random.normal(kw, (F, F), jnp.float32) / np.sqrt(F)   # Linear weight [out, in]

    # --- shared 2-D adjacency path ---
    out2 = jax.block_until_ready(sgc_forward(x, A2, W))
    assert out2.shape == (B, N, F)
    np.testing.assert_allclose(np.asarray(out2), np.asarray(reference_forward(x, A2, W)),
                               rtol=1e-4, atol=1e-4)

    # --- per-batch 3-D adjacency path ---
    out3 = jax.block_until_ready(sgc_forward(x, A3, W))
    assert out3.shape == (B, N, F)
    np.testing.assert_allclose(np.asarray(out3), np.asarray(reference_forward(x, A3, W)),
                               rtol=1e-4, atol=1e-4)

    # --- larger ragged graph: exercises K-tiling + in-kernel tail masking ---
    N2 = 600
    xb = jax.random.normal(kx2, (B, N2, F), jnp.float32)
    A2b = jax.nn.softmax(jax.random.normal(ka4, (N2, N2), jnp.float32), axis=-1)
    A3b = jax.nn.softmax(jax.random.normal(ka5, (B, N2, N2), jnp.float32), axis=-1)

    out2b = jax.block_until_ready(sgc_forward(xb, A2b, W))
    np.testing.assert_allclose(np.asarray(out2b), np.asarray(reference_forward(xb, A2b, W)),
                               rtol=1e-4, atol=1e-4)

    out3b = jax.block_until_ready(sgc_forward(xb, A3b, W))
    np.testing.assert_allclose(np.asarray(out3b), np.asarray(reference_forward(xb, A3b, W)),
                               rtol=1e-4, atol=1e-4)

    print("KERNEL_OK")
</pallas_src>

<mosaic_0001>
module attributes {stable_mosaic.version = 11 : i64} {
  func.func @kernel(%arg0: i32, %arg1: i32, %arg2: memref<8x16xf32, #tpu.memory_space<vmem>>, %arg3: memref<16x64xf32, #tpu.memory_space<vmem>>, %arg4: memref<8x64xf32, #tpu.memory_space<vmem>>, %arg5: memref<8x64xf32, #tpu.memory_space<vmem>>) attributes {dimension_semantics = [#tpu.dimension_semantics<parallel>, #tpu.dimension_semantics<arbitrary>], iteration_bounds = array<i64: 2, 1>, scalar_prefetch = 0 : i64, scratch_operands = 1 : i64, tpu.core_type = #tpu.core_type<tc>, window_params = [{transform_indices = @transform_0, window_bounds = array<i64: 8, 16>}, {transform_indices = @transform_1, window_bounds = array<i64: 16, 64>}, {transform_indices = @transform_2, window_bounds = array<i64: 8, 64>}]} {
    %c0_i32 = arith.constant 0 : i32
    %0 = arith.cmpi eq, %arg1, %c0_i32 : i32
    %1 = arith.extui %0 : i1 to i32
    %c0_i32_0 = arith.constant 0 : i32
    %2 = arith.cmpi ne, %1, %c0_i32_0 : i32
    scf.if %2 {
      %cst_10 = arith.constant 0.000000e+00 : f32
      %12 = vector.broadcast %cst_10 : f32 to vector<8x64xf32>
      %c0_11 = arith.constant 0 : index
      %c0_12 = arith.constant 0 : index
      %13 = vector.load %arg5[%c0_11, %c0_12] : memref<8x64xf32, #tpu.memory_space<vmem>>, vector<8x64xf32>
      tpu.vector_store %arg5[%c0_11, %c0_12], %12 {strides = array<i32>} : memref<8x64xf32, #tpu.memory_space<vmem>>, vector<8x64xf32>,
    } else {
    }
    %c0 = arith.constant 0 : index
    %c0_1 = arith.constant 0 : index
    %3 = vector.load %arg2[%c0, %c0_1] : memref<8x16xf32, #tpu.memory_space<vmem>>, vector<8x16xf32>
    %c0_2 = arith.constant 0 : index
    %c0_3 = arith.constant 0 : index
    %4 = vector.load %arg5[%c0_2, %c0_3] : memref<8x64xf32, #tpu.memory_space<vmem>>, vector<8x64xf32>
    %c0_4 = arith.constant 0 : index
    %c0_5 = arith.constant 0 : index
    %5 = vector.load %arg3[%c0_4, %c0_5] : memref<16x64xf32, #tpu.memory_space<vmem>>, vector<16x64xf32>
    %cst = arith.constant dense<0.000000e+00> : vector<8x64xf32>
    %6 = tpu.matmul %3, %5, %cst {dimension_numbers = #tpu.dot_dimension_numbers<[1], [0], [0], [1], [0, 0, 1, 1], [], []>} : vector<8x16xf32>, vector<16x64xf32>, vector<8x64xf32> -> vector<8x64xf32>
    %7 = arith.addf %4, %6 : vector<8x64xf32>
    %c0_6 = arith.constant 0 : index
    %c0_7 = arith.constant 0 : index
    %8 = vector.load %arg5[%c0_6, %c0_7] : memref<8x64xf32, #tpu.memory_space<vmem>>, vector<8x64xf32>
    tpu.vector_store %arg5[%c0_6, %c0_7], %7 {strides = array<i32>} : memref<8x64xf32, #tpu.memory_space<vmem>>, vector<8x64xf32>,
    %c0_i32_8 = arith.constant 0 : i32
    %9 = arith.cmpi eq, %arg1, %c0_i32_8 : i32
    %10 = arith.extui %9 : i1 to i32
    %c0_i32_9 = arith.constant 0 : i32
    %11 = arith.cmpi ne, %10, %c0_i32_9 : i32
    scf.if %11 {
      %c0_10 = arith.constant 0 : index
      %c0_11 = arith.constant 0 : index
      %12 = vector.load %arg5[%c0_10, %c0_11] : memref<8x64xf32, #tpu.memory_space<vmem>>, vector<8x64xf32>
      %cst_12 = arith.constant 0.000000e+00 : f32
      %13 = vector.broadcast %cst_12 : f32 to vector<8x64xf32>
      %14 = arith.maximumf %12, %13 : vector<8x64xf32>
      %c0_13 = arith.constant 0 : index
      %c0_14 = arith.constant 0 : index
      %15 = vector.load %arg4[%c0_13, %c0_14] : memref<8x64xf32, #tpu.memory_space<vmem>>, vector<8x64xf32>
      tpu.vector_store %arg4[%c0_13, %c0_14], %14 {strides = array<i32>} : memref<8x64xf32, #tpu.memory_space<vmem>>, vector<8x64xf32>,
    } else {
    }
    return
  }
  func.func @transform_0(%arg0: i32, %arg1: i32) -> (i32, i32) {
    %c0_i32 = arith.constant 0 : i32
    return %arg0, %arg1 : i32, i32
  }
  func.func @transform_1(%arg0: i32, %arg1: i32) -> (i32, i32) {
    %c0_i32 = arith.constant 0 : i32
    %c0_i32_0 = arith.constant 0 : i32
    return %arg1, %c0_i32 : i32, i32
  }
  func.func @transform_2(%arg0: i32, %arg1: i32) -> (i32, i32) {
    %c0_i32 = arith.constant 0 : i32
    %c0_i32_0 = arith.constant 0 : i32
    return %arg0, %c0_i32 : i32, i32
  }
}

</mosaic_0001>

<llo_original>
// kernel: tpu_custom_call.1
$region0: #{tpu_custom_call.1}
  #allocation0 [shape = 'u32[]', space=smem, size = 0x4, offset = 0x4, fixed_abs, tag = 'smem constant byte address 0x4 - core index']
  #allocation1 [shape = 'u32[144,128]{1,0:T(1,128)}', space=vmem, size = 0x12000, scoped, tag = 'internal scratch']
  #allocation2 [shape = 'f32[8,64]{1,0:T(8,128)}', space=vmem, size = 0x1000, scoped, tag = 'scratch operand']
  %s0 = inlined_call_operand.hbm [shape: f32[16,16], index: 0, kind: input, shape index: {}]
  %s1 = inlined_call_operand.hbm [shape: f32[16,64], index: 1, kind: input, shape index: {}]
  %s2 = inlined_call_operand.hbm [shape: f32[16,64], index: 2, kind: output, shape index: {}]
  %s3 = sld [smem:[#allocation0]]
  $region57: #{tpu_custom_call.1} parent=0
    _
  %s5 = ssub.s32 1, %s3
  %s6 = scalar_select 0, %s5, %s3
  $region1: #{tpu_custom_call.1} parent=0
    #allocation3 [shape = 'u8[8192]{0}', space=vmem, size = 0x2000, scoped, tag = 'input window, operand 0']
    #allocation4 [shape = 's32[2]{0}', space=sflag, size = 0x8, scoped, tag = 'scoped memory for tpu_custom_call.1']
    #allocation5 [shape = 's32[2]{0}', space=sflag, size = 0x8, scoped, tag = 'scoped memory for tpu_custom_call.1']
    #allocation6 [shape = 'u8[8192]{0}', space=vmem, size = 0x2000, scoped, tag = 'input window, operand 1, single buffered']
    #allocation7 [shape = 's32[1]{0}', space=sflag, size = 0x4, scoped, tag = 'scoped memory for tpu_custom_call.1']
    #allocation8 [shape = 'u8[8192]{0}', space=vmem, size = 0x2000, scoped, tag = 'output window, operand 0']
    %7 = vsyncpa [#allocation4], 0
    %s8 = scalar_lea.sflag [#allocation4], 1
    %9 = vsyncpa %s8, 0
    %10 = vsyncpa [#allocation7], 0
    %11 = vsyncpa [#allocation5], 0
    %s12 = scalar_lea.sflag [#allocation5], 1
    %13 = vsyncpa %s12, 0
    loop: start=0, step=1, limit=4
    $region2: #{tpu_custom_call.1} parent=1 // loop_pre_header
      _
    $region3: #{tpu_custom_call.1} parent=1 // loop_header
      %s15 = sphi 0, %s19
      %p16 = scmp.ge.s32.totalorder %s15, 4
      %s22 = sphi 0, %s34
      %s23 = sphi 0, %s30
      %s24 = sphi 0, %s22
      %s25 = sphi 0, %s23
      %s26 = sphi 0, %s24
      %s27 = sphi 0, %s25
      %s39 = sphi 0, %s41
      %s42 = sphi 0, %s39
      %s43 = sphi 0, %s42
      %s59 = sphi 0, %s43
      %s65 = sphi 0, %s67
      %s68 = sphi 0, %s65
      %s69 = sphi 0, %s68
      %s85 = sphi 0, %s69
      %s91 = sphi 0, %s93
      %s94 = sphi 0, %s91
      %s95 = sphi 0, %s94
      %s111 = sphi 0, %s95
    $region4: #{tpu_custom_call.1} parent=1 // loop_header_branch
      %18 = sbr.rel (%p16) target = $region8
    $region5: #{tpu_custom_call.1} parent=1 // loop_body
      %s20 = ssub.s32 %s15, 1
      %s21 = ssub.s32 %s15, 2
      %s28 = sadd.s32 1, %s23
      %p29 = scmp.ge.s32.totalorder %s28, 1
      %s30 = scalar_select %p29, 0, %s28
      %s31 = sadd.s32 1, %s22
      %s32 = scalar_select %p29, %s31, %s22
      %p33 = scmp.ge.s32.totalorder %s32, 2
      %s34 = scalar_select %p33, 0, %s32
      %s35 = ssub.s32 %s22, %s34
      %s36 = ssub.s32 %s23, %s30
      %s37 = sor.u32 %s35, %s36
      %p38 = scmp.eq.s32.totalorder %s37, 0
      %s40 = sadd.s32 %s39, 1
      %s41 = scalar_select %p38, %s39, %s40
      %p44 = pneg %p38
      %p45 = scmp.eq.s32.totalorder %s15, 1
      %p46 = por %p44, %p45
      %p47 = scmp.ne.s32.totalorder %s39, %s42
      %p48 = scmp.eq.s32.totalorder %s15, 0
      %p49 = por %p47, %p48
      %p50 = scmp.ne.s32.totalorder %s39, %s42
      %p51 = scmp.eq.s32.totalorder %s20, 1
      %p52 = por %p50, %p51
      %p53 = scmp.ne.s32.totalorder %s42, %s43
      %p54 = scmp.eq.s32.totalorder %s20, 0
      %p55 = por %p53, %p54
      %p56 = scmp.ne.s32.totalorder %s42, %s43
      %p57 = scmp.eq.s32.totalorder %s21, 1
      %p58 = por %p56, %p57
      %p60 = scmp.ne.s32.totalorder %s43, %s59
      %p61 = scmp.eq.s32.totalorder %s21, 0
      %p62 = por %p60, %p61
      %s63 = ssub.s32 %s23, %s30
      %p64 = scmp.eq.s32.totalorder %s63, 0
      %s66 = sadd.s32 %s65, 1
      %s67 = scalar_select %p64, %s65, %s66
      %p70 = pneg %p64
      %p71 = scmp.eq.s32.totalorder %s15, 1
      %p72 = por %p70, %p71
      %p73 = scmp.ne.s32.totalorder %s65, %s68
      %p74 = scmp.eq.s32.totalorder %s15, 0
      %p75 = por %p73, %p74
      %p76 = scmp.ne.s32.totalorder %s65, %s68
      %p77 = scmp.eq.s32.totalorder %s20, 1
      %p78 = por %p76, %p77
      %p79 = scmp.ne.s32.totalorder %s68, %s69
      %p80 = scmp.eq.s32.totalorder %s20, 0
      %p81 = por %p79, %p80
      %p82 = scmp.ne.s32.totalorder %s68, %s69
      %p83 = scmp.eq.s32.totalorder %s21, 1
      %p84 = por %p82, %p83
      %p86 = scmp.ne.s32.totalorder %s69, %s85
      %p87 = scmp.eq.s32.totalorder %s21, 0
      %p88 = por %p86, %p87
      %s89 = ssub.s32 %s22, %s34
      %p90 = scmp.eq.s32.totalorder %s89, 0
      %s92 = sadd.s32 %s91, 1
      %s93 = scalar_select %p90, %s91, %s92
      %p96 = pneg %p90
      %p97 = scmp.eq.s32.totalorder %s15, 1
      %p98 = por %p96, %p97
      %p99 = scmp.ne.s32.totalorder %s91, %s94
      %p100 = scmp.eq.s32.totalorder %s15, 0
      %p101 = por %p99, %p100
      %p102 = scmp.ne.s32.totalorder %s91, %s94
      %p103 = scmp.eq.s32.totalorder %s20, 1
      %p104 = por %p102, %p103
      %p105 = scmp.ne.s32.totalorder %s94, %s95
      %p106 = scmp.eq.s32.totalorder %s20, 0
      %p107 = por %p105, %p106
      %p108 = scmp.ne.s32.totalorder %s94, %s95
      %p109 = scmp.eq.s32.totalorder %s21, 1
      %p110 = por %p108, %p109
      %p112 = scmp.ne.s32.totalorder %s95, %s111
      %p113 = scmp.eq.s32.totalorder %s21, 0
      %p114 = por %p112, %p113
      %p115 = scmp.le.s32.totalorder 1, %s15
      %p116 = scmp.lt.s32.totalorder %s15, 3
      %p117 = pnand %p115, %p116
      %p118 = pneg %p117
      // Predicated region
      $region9: #{tpu_custom_call.1} parent=5 // pred_check
        _
      $region10: #{tpu_custom_call.1} parent=5 // pred_check_branch
        %120 = sbr.rel (%p117) target = $region12
      $region11: #{tpu_custom_call.1} parent=5 // pred_region
        %s121 = ssub.s32 %s15, 1
        // Predicated region
        $region13: #{tpu_custom_call.1} parent=11 // pred_check
          %p122 = pneg %p81
        $region14: #{tpu_custom_call.1} parent=11 // pred_check_branch
          %124 = sbr.rel (%p122) target = $region16
        $region15: #{tpu_custom_call.1} parent=11 // pred_region
          %s125 = smul.u32 2, %s25
          %s127 = ssub.s32 256, 256
          %128 = vsyncadd [#allocation7], %s127
          %s129 = smul.addr %s125, 128
          %s130 = scalar_lea.hbm %s1, %s129
          %s131 = sshll.u32 [#allocation6], 4
          %s132 = int_to_ptr.vmem [resolvable:$true] %s131
          %137 = dma.hbm_to_vmem [thread:$0]  %s130, 256, %s132, [#allocation7], 128, 128, 8
        $region16: #{tpu_custom_call.1} parent=11 // pred_fallthru
          _
      $region12: #{tpu_custom_call.1} parent=5 // pred_fallthru
        _
      %p138 = scmp.lt.s32.totalorder %s15, 2
      // Predicated region
      $region17: #{tpu_custom_call.1} parent=5 // pred_check
        %p139 = pneg %p138
      $region18: #{tpu_custom_call.1} parent=5 // pred_check_branch
        %141 = sbr.rel (%p139) target = $region20
      $region19: #{tpu_custom_call.1} parent=5 // pred_region
        // Predicated region
        $region21: #{tpu_custom_call.1} parent=19 // pred_check
          %p142 = pneg %p49
        $region22: #{tpu_custom_call.1} parent=19 // pred_check_branch
          %144 = sbr.rel (%p142) target = $region24
        $region23: #{tpu_custom_call.1} parent=19 // pred_region
          %s145 = sand.u32 %s39, 1
          %s146 = scalar_lea.sflag [#allocation4], %s145
          %s147 = sand.u32 %s39, 1
          %s148 = smul.addr %s147, 8
          %s149 = scalar_lea.vmem [#allocation3], %s148
          %s151 = ssub.s32 128, 128
          %152 = vsyncadd %s146, %s151
          %s153 = sadd.s32 %s23, %s22
          %s154 = smul.addr %s153, 128
          %s155 = scalar_lea.hbm %s0, %s154
          %s157 = sshll.u32 %s149, 4
          %s158 = int_to_ptr.vmem [resolvable:$true] %s157
          %160 = dma.hbm_to_vmem [thread:$0]  %s155, 128, %s158, %s146
        $region24: #{tpu_custom_call.1} parent=19 // pred_fallthru
          _
      $region20: #{tpu_custom_call.1} parent=5 // pred_fallthru
        _
      %p161 = scmp.le.s32.totalorder 1, %s15
      %p162 = scmp.lt.s32.totalorder %s15, 3
      %p163 = pnand %p161, %p162
      %p164 = pneg %p163
      // Predicated region
      $region25: #{tpu_custom_call.1} parent=5 // pred_check
        _
      $region26: #{tpu_custom_call.1} parent=5 // pred_check_branch
        %166 = sbr.rel (%p163) target = $region28
      $region27: #{tpu_custom_call.1} parent=5 // pred_region
        %s167 = ssub.s32 %s15, 1
        %s168 = sand.u32 %s42, 1
        %s169 = scalar_lea.sflag [#allocation4], %s168
        %s170 = sand.u32 %s42, 1
        %s171 = smul.addr %s170, 8
        %s172 = scalar_lea.vmem [#allocation3], %s171
        // Predicated region
        $region29: #{tpu_custom_call.1} parent=27 // pred_check
          %p173 = pneg %p55
        $region30: #{tpu_custom_call.1} parent=27 // pred_check_branch
          %175 = sbr.rel (%p173) target = $region32
        $region31: #{tpu_custom_call.1} parent=27 // pred_region
          %176 = dma.done %s169, 128
        $region32: #{tpu_custom_call.1} parent=27 // pred_fallthru
          _
        // Predicated region
        $region33: #{tpu_custom_call.1} parent=27 // pred_check
          %p177 = pneg %p81
        $region34: #{tpu_custom_call.1} parent=27 // pred_check_branch
          %179 = sbr.rel (%p177) target = $region36
        $region35: #{tpu_custom_call.1} parent=27 // pred_region
          %180 = dma.done [#allocation7], 256
        $region36: #{tpu_custom_call.1} parent=27 // pred_fallthru
          _
        %s181 = sand.u32 %s42, 1
        %s182 = scalar_lea.sflag [#allocation4], %s181
        %s183 = sand.u32 %s42, 1
        %s184 = smul.addr %s183, 8
        %s185 = scalar_lea.vmem [#allocation3], %s184
        %p186 = pneg %p55
        %p187 = pneg %p52
        %p188 = pneg %p81
        %p189 = pneg %p78
        %p190 = pneg %p107
        %p191 = pneg %p104
        %s192 = sand.u32 %s94, 1
        %s193 = scalar_lea.sflag [#allocation5], %s192
        %s194 = sand.u32 %s94, 1
        %s195 = smul.addr %s194, 8
        %s196 = scalar_lea.vmem [#allocation8], %s195
        %s197 = smul.u32 2, %s25
        %p198 = scmp.eq.s32.totalorder %s25, 0
        // Predicated region
        $region37: #{tpu_custom_call.1} parent=27 // pred_check
          %p199 = pneg %p198
        $region38: #{tpu_custom_call.1} parent=27 // pred_check_branch
          %201 = sbr.rel (%p199) target = $region40
        $region39: #{tpu_custom_call.1} parent=27 // pred_region
          %vm202 = vcmask 523264
          %203 = vst.msk [vmem:[#allocation2] sm:$0xff] %vm202, 0.0
        $region40: #{tpu_custom_call.1} parent=27 // pred_fallthru
          _
        %v204 = vld [vmem:[%s172] sm:$0xff]
        %v205 = vld [vmem:[#allocation2] sm:$0xff]
        %v206 = vld [vmem:[#allocation6] sm:$0xff]
        %v207 = vld [vmem:[#allocation6 + $0x8] sm:$0xff]
        %vm208 = vcmask 130048
        %v210 = vsel %vm208, %v204, 0
        %212 = vmatprep.subr.mxu0 0.0
        %213 = vmatpush1.msra.mxu0 %v206
        %214 = vmatprep.subr.mxu0 0.0
        %215 = vmatpush1.msra.mxu0 %v207
        %216 = vmatprep.subr.mxu0 0.0
        %217 = vmatpush1.msra.mxu0 0.0
        %218 = vmatprep.subr.mxu0 0.0
        %219 = vmatpush1.msra.mxu0 0.0
        %220 = vmatprep.subr.mxu0 0.0
        %221 = vmatpush1.msra.mxu0 0.0
        %222 = vmatprep.subr.mxu0 0.0
        %223 = vmatpush1.msra.mxu0 0.0
        %224 = vmatprep.subr.mxu0 0.0
        %225 = vmatpush1.msra.mxu0 0.0
        %226 = vmatprep.subr.mxu0 0.0
        %227 = vmatpush1.msra.mxu0 0.0
        %228 = vmatprep.subr.mxu0 0.0
        %229 = vmatpush1.msra.mxu0 0.0
        %230 = vmatprep.subr.mxu0 0.0
        %231 = vmatpush1.msra.mxu0 0.0
        %232 = vmatprep.subr.mxu0 0.0
        %233 = vmatpush1.msra.mxu0 0.0
        %234 = vmatprep.subr.mxu0 0.0
        %235 = vmatpush1.msra.mxu0 0.0
        %236 = vmatprep.subr.mxu0 0.0
        %237 = vmatpush1.msra.mxu0 0.0
        %238 = vmatprep.subr.mxu0 0.0
        %239 = vmatpush1.msra.mxu0 0.0
        %240 = vmatprep.subr.mxu0 0.0
        %241 = vmatpush1.msra.mxu0 0.0
        %242 = vmatprep.subr.mxu0 0.0
        %243 = vmatpush1.msra.mxu0 0.0
        %244 = vmatprep.subr.mxu0 0.0
        %245 = vmatpush1.msra.mxu0 0.0
        %246 = vmatprep.subr.mxu0 0.0
        %247 = vmatpush1.msra.mxu0 0.0
        %248 = vmatprep.subr.mxu0 0.0
        %249 = vmatpush1.msra.mxu0 0.0
        %250 = vmatprep.subr.mxu0 0.0
        %251 = vmatpush1.msra.mxu0 0.0
        %252 = vmatprep.subr.mxu0 0.0
        %253 = vmatpush1.msra.mxu0 0.0
        %254 = vmatprep.subr.mxu0 0.0
        %255 = vmatpush1.msra.mxu0 0.0
        %256 = vmatprep.subr.mxu0 0.0
        %257 = vmatpush1.msra.mxu0 0.0
        %258 = vmatprep.subr.mxu0 0.0
        %259 = vmatpush1.msra.mxu0 0.0
        %260 = vmatprep.subr.mxu0 0.0
        %261 = vmatpush1.msra.mxu0 0.0
        %262 = vmatprep.subr.mxu0 0.0
        %263 = vmatpush1.msra.mxu0 0.0
        %264 = vmatprep.subr.mxu0 0.0
        %265 = vmatpush1.msra.mxu0 0.0
        %266 = vmatprep.subr.mxu0 0.0
        %267 = vmatpush1.msra.mxu0 0.0
        %268 = vmatprep.subr.mxu0 0.0
        %269 = vmatpush1.msra.mxu0 0.0
        %270 = vmatprep.subr.mxu0 0.0
        %271 = vmatpush1.msra.mxu0 0.0
        %272 = vmatprep.subr.mxu0 0.0
        %273 = vmatpush1.msra.mxu0 0.0
        %274 = vmatprep.subr.mxu0 0.0
        %275 = vmatpush1.msra.mxu0 0.0
        %276 = vmatprep.mubr.f32.mxu0 0.0
        %277 = vmatmul.mubr.f32.gmra.mrb[0].mxu0 %v210
        %v278 = vpop.f32.mrb[0].mxu0
        %v279 = vadd.f32 0.0, %v278
        %v280 = vpop.f32.mrb[0].mxu0
        %281 = vdwg.mxu0
        %v282 = vadd.f32 %v205, %v279
        %vm283 = vcmask 523264
        %284 = vst.msk [vmem:[#allocation2] sm:$0xff] %vm283, %v282
        // Predicated region
        $region41: #{tpu_custom_call.1} parent=27 // pred_check
          %p285 = pneg %p198
        $region42: #{tpu_custom_call.1} parent=27 // pred_check_branch
          %287 = sbr.rel (%p285) target = $region44
        $region43: #{tpu_custom_call.1} parent=27 // pred_region
          %v288 = vld [vmem:[#allocation2] sm:$0xff]
          %v289 = vmax.f32 %v288, 0.0
          %290 = vst.msk [vmem:[%s196] sm:$0xff] %vm283, %v289
        $region44: #{tpu_custom_call.1} parent=27 // pred_fallthru
          _
        %s291 = sand.u32 %s94, 1
        %s292 = scalar_lea.sflag [#allocation5], %s291
        %s293 = sand.u32 %s94, 1
        %s294 = smul.addr %s293, 8
        %s295 = scalar_lea.vmem [#allocation8], %s294
        // Predicated region
        $region45: #{tpu_custom_call.1} parent=27 // pred_check
          %p296 = pneg %p104
        $region46: #{tpu_custom_call.1} parent=27 // pred_check_branch
          %298 = sbr.rel (%p296) target = $region48
        $region47: #{tpu_custom_call.1} parent=27 // pred_region
          %s300 = ssub.s32 128, 128
          %301 = vsyncadd %s292, %s300
          %s302 = smul.addr %s24, 128
          %s303 = scalar_lea.hbm %s2, %s302
          %s305 = sshll.u32 %s295, 4
          %s306 = int_to_ptr.vmem [resolvable:$true] %s305
          %308 = dma.vmem_to_hbm [thread:$0]  %s306, 128, %s303, %s292
        $region48: #{tpu_custom_call.1} parent=27 // pred_fallthru
          _
      $region28: #{tpu_custom_call.1} parent=5 // pred_fallthru
        _
      %p309 = scmp.le.s32.totalorder 2, %s15
      // Predicated region
      $region49: #{tpu_custom_call.1} parent=5 // pred_check
        %p310 = pneg %p309
      $region50: #{tpu_custom_call.1} parent=5 // pred_check_branch
        %312 = sbr.rel (%p310) target = $region52
      $region51: #{tpu_custom_call.1} parent=5 // pred_region
        %s313 = ssub.s32 %s15, 2
        // Predicated region
        $region53: #{tpu_custom_call.1} parent=51 // pred_check
          %p314 = pneg %p110
        $region54: #{tpu_custom_call.1} parent=51 // pred_check_branch
          %316 = sbr.rel (%p314) target = $region56
        $region55: #{tpu_custom_call.1} parent=51 // pred_region
          %s317 = sand.u32 %s95, 1
          %s318 = scalar_lea.sflag [#allocation5], %s317
          %s319 = sand.u32 %s95, 1
          %s320 = smul.addr %s319, 8
          %s321 = scalar_lea.vmem [#allocation8], %s320
          %322 = dma.done %s318, 128
        $region56: #{tpu_custom_call.1} parent=51 // pred_fallthru
          _
      $region52: #{tpu_custom_call.1} parent=5 // pred_fallthru
        _
    $region6: #{tpu_custom_call.1} parent=1 // loop_footer
      %s19 = sadd.s32 1, %s15
    $region7: #{tpu_custom_call.1} parent=1 // loop_footer_branch
      %14 = sbr.rel target = $region3
    $region8: #{tpu_custom_call.1} parent=1 // loop_exit
      _
    %323 = vsyncpa [#allocation4], 1
    %s324 = scalar_lea.sflag [#allocation4], 1
    %325 = vsyncpa %s324, 1
    %326 = vsyncpa [#allocation7], 1
    %327 = vsyncpa [#allocation5], 1
    %s328 = scalar_lea.sflag [#allocation5], 1
    %329 = vsyncpa %s328, 1

</llo_original>
